<compile_context>
chip_gen: v5e
topology: v5e:2x2
jax: 0.10.0
libtpu: 0.0.40
codegen_flags: <defaults>
</compile_context>

<pallas_src>
import functools

import numpy as np

import jax
import jax.numpy as jnp
from jax.experimental import pallas as pl

LANE = 128  # TPU lane width; padded row width Wp*Cin is rounded up to this.


def _conv_relu_kernel(x_ref, w_ref, b_ref, o_ref):
    """Whole batch in one step: row-window im2col + one MXU matmul + bias + ReLU.

    x_ref: (N, Hp, LANE)      bf16  zero-padded NHWC rows, lane-padded to LANE
    w_ref: (KH*LANE, W*Cout)  bf16  Toeplitz-packed conv weight (zero pad rows)
    b_ref: (1, W*Cout)        f32   bias replicated per (w, cout) column
    o_ref: (N, H, W*Cout)     f32   lane-dense output rows
    """
    N, H, WC = o_ref.shape
    _, Hp, lane = x_ref.shape
    KH = Hp - H + 1

    x = x_ref[...]
    # im2col over row taps only; chunks are lane-aligned (offsets 0, LANE,
    # 2*LANE), so the concatenate is pure vreg placement (no cross-lane work).
    patches = jnp.concatenate([x[:, kh:kh + H, :] for kh in range(KH)], axis=-1)
    patches = patches.reshape(N * H, KH * lane)               # (N*H, KH*LANE)

    acc = jnp.dot(patches, w_ref[...],
                  preferred_element_type=jnp.float32)         # (N*H, W*Cout) f32
    acc = acc + b_ref[...]
    o_ref[...] = jnp.maximum(acc, 0.0).reshape(N, H, WC).astype(o_ref.dtype)


def pack_conv_params(weight, bias, W):
    """One-time (init-time) packing of Conv2d params — off the per-call path.

    weight: (Cout, Cin, KH, KW) PyTorch layout; bias: (Cout,)
    Returns:
      w_packed: (KH*LANE, W*Cout) bf16 Toeplitz matmul weight,
                B[(kh, wp*Cin+cin), (w*Cout+cout)] = weight[cout,cin,kh,wp-w]
                for 0 <= wp-w < KW, else 0 (incl. lane-pad rows).
      b_packed: (1, W*Cout) f32 bias replicated per output column.
    """
    weight = np.asarray(weight, np.float32)
    bias = np.asarray(bias, np.float32)
    Cout, Cin, KH, KW = weight.shape
    Wp = W + KW - 1
    assert Wp * Cin <= LANE, "row width must fit one lane group"

    packed = np.zeros((KH, LANE, W * Cout), np.float32)
    for kh in range(KH):
        for kw in range(KW):
            blk = weight[:, :, kh, kw].T                      # (Cin, Cout)
            for w in range(W):
                wp = w + kw
                packed[kh, wp * Cin:(wp + 1) * Cin,
                       w * Cout:(w + 1) * Cout] = blk
    w_packed = jnp.asarray(packed.reshape(KH * LANE, W * Cout), jnp.bfloat16)
    b_packed = jnp.asarray(np.tile(bias, W).reshape(1, W * Cout), jnp.float32)
    return w_packed, b_packed


@functools.partial(jax.jit, static_argnames=("cout", "kh", "kw"))
def quantnet_forward(x_nchw, w_packed, b_packed, *, cout, kh, kw):
    """QuantNet.forward: res = self.net(x); net = Conv2d(3x3, pad=1) + ReLU.

    x_nchw : (N, Cin, H, W) f32 (PyTorch NCHW contract)
    returns: (N, Cout, H, W) f32
    """
    N, Cin, H, W = x_nchw.shape
    ph, pw = (kh - 1) // 2, (kw - 1) // 2
    Hp, Wp = H + kh - 1, W + kw - 1
    WC = W * cout

    # Input glue (one fused XLA region): NCHW -> zero-padded NHWC rows with the
    # trailing (Wp, Cin) dims flattened and lane-padded to LANE, cast to bf16.
    # If the surrounding model supplies NHWC rows directly, this disappears.
    x_rows = jnp.pad(jnp.transpose(x_nchw, (0, 2, 3, 1)),
                     ((0, 0), (ph, ph), (pw, pw), (0, 0))).reshape(N, Hp, Wp * Cin)
    x_rows = jnp.pad(x_rows, ((0, 0), (0, 0), (0, LANE - Wp * Cin)))
    x_rows = x_rows.astype(jnp.bfloat16)

    out_rows = pl.pallas_call(
        _conv_relu_kernel,
        out_shape=jax.ShapeDtypeStruct((N, H, WC), jnp.float32),
        grid=(1,),  # single step: whole batch fused into the matmul M dim
        in_specs=[
            pl.BlockSpec((N, Hp, LANE), lambda i: (0, 0, 0)),
            pl.BlockSpec((kh * LANE, WC), lambda i: (0, 0)),
            pl.BlockSpec((1, WC), lambda i: (0, 0)),
        ],
        out_specs=pl.BlockSpec((N, H, WC), lambda i: (0, 0, 0)),
    )(x_rows, w_packed, b_packed)

    # Output glue (one fused XLA region): (N, H, W*Cout) -> NCHW for PyTorch parity.
    return jnp.transpose(out_rows.reshape(N, H, W, cout), (0, 3, 1, 2))


def _reference_forward(x_nchw, weight, bias):
    """Pure-JAX f32 reference (lax conv) for correctness check."""
    out = jax.lax.conv_general_dilated(
        x_nchw, weight,
        window_strides=(1, 1), padding="SAME",
        dimension_numbers=("NCHW", "OIHW", "NCHW"))
    return jnp.maximum(out + bias.reshape(1, -1, 1, 1), 0.0)


if __name__ == "__main__":
    key = jax.random.PRNGKey(0)
    kx, kwt, kb = jax.random.split(key, 3)

    N, Cin, H, W = 2, 4, 16, 16
    Cout, KH, KW = 8, 3, 3

    x = jax.random.normal(kx, (N, Cin, H, W), dtype=jnp.float32)
    # Deterministic synthetic conv parameters (PyTorch-style fan_in scaling).
    fan_in = Cin * KH * KW
    weight = jax.random.normal(kwt, (Cout, Cin, KH, KW), dtype=jnp.float32) / np.sqrt(fan_in)
    bias = jax.random.normal(kb, (Cout,), dtype=jnp.float32) * 0.1

    # Init-time packing (QuantNet.__init__ analogue) — not on the forward path.
    w_packed, b_packed = pack_conv_params(np.asarray(weight), np.asarray(bias), W)

    out = jax.block_until_ready(
        quantnet_forward(x, w_packed, b_packed, cout=Cout, kh=KH, kw=KW))
    ref = jax.block_until_ready(_reference_forward(x, weight, bias))

    # bf16 MXU feed with f32 accumulation: relaxed tolerance vs f32 reference.
    np.testing.assert_allclose(np.asarray(out), np.asarray(ref), rtol=5e-2, atol=5e-2)
    assert out.shape == (N, Cout, H, W)
    print("KERNEL_OK")
</pallas_src>

<mosaic_0001>
module attributes {stable_mosaic.version = 11 : i64} {
  func.func @_conv_relu_kernel(%arg0: i32, %arg1: memref<2x18x128xbf16, #tpu.memory_space<vmem>>, %arg2: memref<384x128xbf16, #tpu.memory_space<vmem>>, %arg3: memref<1x128xf32, #tpu.memory_space<vmem>>, %arg4: memref<2x16x128xf32, #tpu.memory_space<vmem>>) attributes {dimension_semantics = [#tpu.dimension_semantics<arbitrary>], iteration_bounds = array<i64: 1>, scalar_prefetch = 0 : i64, scratch_operands = 0 : i64, tpu.core_type = #tpu.core_type<tc>, window_params = [{pipeline_mode = #tpu.pipeline_mode<synchronous>, transform_indices = @transform_0, window_bounds = array<i64: 2, 18, 128>}, {pipeline_mode = #tpu.pipeline_mode<synchronous>, transform_indices = @transform_1, window_bounds = array<i64: 384, 128>}, {pipeline_mode = #tpu.pipeline_mode<synchronous>, transform_indices = @transform_2, window_bounds = array<i64: 1, 128>}, {pipeline_mode = #tpu.pipeline_mode<synchronous>, transform_indices = @transform_3, window_bounds = array<i64: 2, 16, 128>}]} {
    %c0 = arith.constant 0 : index
    %c0_0 = arith.constant 0 : index
    %c0_1 = arith.constant 0 : index
    %0 = vector.load %arg1[%c0, %c0_0, %c0_1] : memref<2x18x128xbf16, #tpu.memory_space<vmem>>, vector<2x18x128xbf16>
    %1 = vector.extract_strided_slice %0 {offsets = [0, 0, 0], sizes = [2, 16, 128], strides = [1, 1, 1]} : vector<2x18x128xbf16> to vector<2x16x128xbf16>
    %2 = vector.extract_strided_slice %0 {offsets = [0, 1, 0], sizes = [2, 16, 128], strides = [1, 1, 1]} : vector<2x18x128xbf16> to vector<2x16x128xbf16>
    %3 = vector.extract_strided_slice %0 {offsets = [0, 2, 0], sizes = [2, 16, 128], strides = [1, 1, 1]} : vector<2x18x128xbf16> to vector<2x16x128xbf16>
    %4 = tpu.concatenate %1, %2, %3 in 2 : vector<2x16x128xbf16>, vector<2x16x128xbf16>, vector<2x16x128xbf16> -> vector<2x16x384xbf16>
    %5 = vector.shape_cast %4 : vector<2x16x384xbf16> to vector<32x384xbf16>
    %c0_2 = arith.constant 0 : index
    %c0_3 = arith.constant 0 : index
    %6 = vector.load %arg2[%c0_2, %c0_3] : memref<384x128xbf16, #tpu.memory_space<vmem>>, vector<384x128xbf16>
    %cst = arith.constant dense<0.000000e+00> : vector<32x128xf32>
    %7 = tpu.matmul %5, %6, %cst {dimension_numbers = #tpu.dot_dimension_numbers<[1], [0], [0], [1], [0, 0, 1, 1], [], []>} : vector<32x384xbf16>, vector<384x128xbf16>, vector<32x128xf32> -> vector<32x128xf32>
    %c0_4 = arith.constant 0 : index
    %c0_5 = arith.constant 0 : index
    %8 = vector.load %arg3[%c0_4, %c0_5] : memref<1x128xf32, #tpu.memory_space<vmem>>, vector<1x128xf32>
    %9 = vector.broadcast %8 : vector<1x128xf32> to vector<32x128xf32>
    %10 = arith.addf %7, %9 : vector<32x128xf32>
    %cst_6 = arith.constant 0.000000e+00 : f32
    %11 = vector.broadcast %cst_6 : f32 to vector<32x128xf32>
    %12 = arith.maximumf %10, %11 : vector<32x128xf32>
    %13 = vector.shape_cast %12 : vector<32x128xf32> to vector<2x16x128xf32>
    %c0_7 = arith.constant 0 : index
    %c0_8 = arith.constant 0 : index
    %c0_9 = arith.constant 0 : index
    %14 = vector.load %arg4[%c0_7, %c0_8, %c0_9] : memref<2x16x128xf32, #tpu.memory_space<vmem>>, vector<2x16x128xf32>
    tpu.vector_store %arg4[%c0_7, %c0_8, %c0_9], %13 {strides = array<i32>} : memref<2x16x128xf32, #tpu.memory_space<vmem>>, vector<2x16x128xf32>,
    return
  }
  func.func @transform_0(%arg0: i32) -> (i32, i32, i32) {
    %c0_i32 = arith.constant 0 : i32
    %c0_i32_0 = arith.constant 0 : i32
    %c0_i32_1 = arith.constant 0 : i32
    %c0_i32_2 = arith.constant 0 : i32
    return %c0_i32, %c0_i32_0, %c0_i32_1 : i32, i32, i32
  }
  func.func @transform_1(%arg0: i32) -> (i32, i32) {
    %c0_i32 = arith.constant 0 : i32
    %c0_i32_0 = arith.constant 0 : i32
    %c0_i32_1 = arith.constant 0 : i32
    return %c0_i32, %c0_i32_0 : i32, i32
  }
  func.func @transform_2(%arg0: i32) -> (i32, i32) {
    %c0_i32 = arith.constant 0 : i32
    %c0_i32_0 = arith.constant 0 : i32
    %c0_i32_1 = arith.constant 0 : i32
    return %c0_i32, %c0_i32_0 : i32, i32
  }
  func.func @transform_3(%arg0: i32) -> (i32, i32, i32) {
    %c0_i32 = arith.constant 0 : i32
    %c0_i32_0 = arith.constant 0 : i32
    %c0_i32_1 = arith.constant 0 : i32
    %c0_i32_2 = arith.constant 0 : i32
    return %c0_i32, %c0_i32_0, %c0_i32_1 : i32, i32, i32
  }
}

</mosaic_0001>

<llo_original>
// kernel: quantnet_forward.1
$region0: #{quantnet_forward.1}
  #allocation0 [shape = 'u32[]', space=smem, size = 0x4, offset = 0x4, fixed_abs, tag = 'smem constant byte address 0x4 - core index']
  #allocation1 [shape = 'u32[72,128]{1,0:T(1,128)}', space=vmem, size = 0x9000, scoped, tag = 'internal scratch']
  %s0 = inlined_call_operand.vmem [shape: bf16[2,18,128], index: 0, kind: input, shape index: {}]
  %s1 = inlined_call_operand.vmem [shape: bf16[384,128], index: 1, kind: input, shape index: {}]
  %s2 = inlined_call_operand.vmem [shape: f32[1,128], index: 2, kind: input, shape index: {}]
  %s3 = inlined_call_operand.vmem [shape: f32[2,16,128], index: 3, kind: output, shape index: {}]
  %s4 = sld [smem:[#allocation0]]
  $region22: #{quantnet_forward.1} parent=0
    _
  %s6 = ssub.s32 1, %s4
  %s7 = scalar_select 0, %s6, %s4
  // Predicated region
  $region2: #{quantnet_forward.1} parent=0 // pred_check
    _
  $region3: #{quantnet_forward.1} parent=0 // pred_check_branch
    %9 = sbr.rel (0) target = $region5
  $region4: #{quantnet_forward.1} parent=0 // pred_region
    _
  $region5: #{quantnet_forward.1} parent=0 // pred_fallthru
    _
  // Predicated region
  $region6: #{quantnet_forward.1} parent=0 // pred_check
    _
  $region7: #{quantnet_forward.1} parent=0 // pred_check_branch
    %11 = sbr.rel (0) target = $region9
  $region8: #{quantnet_forward.1} parent=0 // pred_region
    _
  $region9: #{quantnet_forward.1} parent=0 // pred_fallthru
    _
  // Predicated region
  $region10: #{quantnet_forward.1} parent=0 // pred_check
    _
  $region11: #{quantnet_forward.1} parent=0 // pred_check_branch
    %13 = sbr.rel (0) target = $region13
  $region12: #{quantnet_forward.1} parent=0 // pred_region
    _
  $region13: #{quantnet_forward.1} parent=0 // pred_fallthru
    _
  %v14 = vld [vmem:[%s0] sm:$0xf]
  %v15 = vld [vmem:[%s0 + $0x4] sm:$0xf]
  %v16 = vld [vmem:[%s0 + $0x8] sm:$0x1]
  %v17 = vld [vmem:[%s0 + $0xc] sm:$0xf]
  %v18 = vld [vmem:[%s0 + $0x10] sm:$0xf]
  %v19 = vld [vmem:[%s0 + $0x14] sm:$0x1]
  %v24 = vunpack.c.l.b16 %v14
  %v25 = vunpack.c.l.b16 %v15
  %v26 = vunpack.c.l.b16 %v17
  %v27 = vunpack.c.l.b16 %v18
  %v28 = vpack.c.b16 %v25, %v24
  %v29 = vpack.c.b16 %v27, %v26
  %v34 = vunpack.c.l.b16 %v16
  %v35 = vunpack.c.l.b16 %v19
  %v36 = vpack.c.b16 %v34, %v34
  %v37 = vpack.c.b16 %v35, %v35
  %vm38 = vsmask.f32 7424
  %v40 = vshrl.u32 %v28, 16
  %v42 = vshll.u32 %v28, 16
  %v44 = vrot.slane %v42, 1
  %v45 = vor.u32 %v40, %v44
  %v47 = vshll.u32 %v36, 16
  %v49 = vrot.slane %v47, 1
  %v50 = vsel %vm38, %v45, %v49
  %v52 = vshrl.u32 %v29, 16
  %v54 = vshll.u32 %v29, 16
  %v56 = vrot.slane %v54, 1
  %v57 = vor.u32 %v52, %v56
  %v59 = vshll.u32 %v37, 16
  %v61 = vrot.slane %v59, 1
  %v62 = vsel %vm38, %v57, %v61
  %vm65 = vcmask 1046528
  %v66 = vrot.slane %v28, 1
  %v67 = vrot.slane %v36, 1
  %v68 = vsel %vm65, %v66, %v67
  %v69 = vrot.slane %v29, 1
  %v70 = vrot.slane %v37, 1
  %v71 = vsel %vm65, %v69, %v70
  %v74 = vld [vmem:[%s1] sm:$0xf]
  %v75 = vld [vmem:[%s1 + $0x4] sm:$0xf]
  %v76 = vld [vmem:[%s1 + $0x8] sm:$0xf]
  %v77 = vld [vmem:[%s1 + $0xc] sm:$0xf]
  %v78 = vld [vmem:[%s1 + $0x10] sm:$0xf]
  %v79 = vld [vmem:[%s1 + $0x14] sm:$0xf]
  %v80 = vld [vmem:[%s1 + $0x18] sm:$0xf]
  %v81 = vld [vmem:[%s1 + $0x1c] sm:$0xf]
  %v82 = vld [vmem:[%s1 + $0x20] sm:$0xf]
  %v83 = vld [vmem:[%s1 + $0x24] sm:$0xf]
  %v84 = vld [vmem:[%s1 + $0x28] sm:$0xf]
  %v85 = vld [vmem:[%s1 + $0x2c] sm:$0xf]
  %v86 = vld [vmem:[%s1 + $0x30] sm:$0xf]
  %v87 = vld [vmem:[%s1 + $0x34] sm:$0xf]
  %v88 = vld [vmem:[%s1 + $0x38] sm:$0xf]
  %v89 = vld [vmem:[%s1 + $0x3c] sm:$0xf]
  %v90 = vld [vmem:[%s1 + $0x40] sm:$0xf]
  %v91 = vld [vmem:[%s1 + $0x44] sm:$0xf]
  %v92 = vld [vmem:[%s1 + $0x48] sm:$0xf]
  %v93 = vld [vmem:[%s1 + $0x4c] sm:$0xf]
  %v94 = vld [vmem:[%s1 + $0x50] sm:$0xf]
  %v95 = vld [vmem:[%s1 + $0x54] sm:$0xf]
  %v96 = vld [vmem:[%s1 + $0x58] sm:$0xf]
  %v97 = vld [vmem:[%s1 + $0x5c] sm:$0xf]
  %v98 = vld [vmem:[%s1 + $0x60] sm:$0xf]
  %v99 = vld [vmem:[%s1 + $0x64] sm:$0xf]
  %v100 = vld [vmem:[%s1 + $0x68] sm:$0xf]
  %v101 = vld [vmem:[%s1 + $0x6c] sm:$0xf]
  %v102 = vld [vmem:[%s1 + $0x70] sm:$0xf]
  %v103 = vld [vmem:[%s1 + $0x74] sm:$0xf]
  %v104 = vld [vmem:[%s1 + $0x78] sm:$0xf]
  %v105 = vld [vmem:[%s1 + $0x7c] sm:$0xf]
  %v106 = vld [vmem:[%s1 + $0x80] sm:$0xf]
  %v107 = vld [vmem:[%s1 + $0x84] sm:$0xf]
  %v108 = vld [vmem:[%s1 + $0x88] sm:$0xf]
  %v109 = vld [vmem:[%s1 + $0x8c] sm:$0xf]
  %v110 = vld [vmem:[%s1 + $0x90] sm:$0xf]
  %v111 = vld [vmem:[%s1 + $0x94] sm:$0xf]
  %v112 = vld [vmem:[%s1 + $0x98] sm:$0xf]
  %v113 = vld [vmem:[%s1 + $0x9c] sm:$0xf]
  %v114 = vld [vmem:[%s1 + $0xa0] sm:$0xf]
  %v115 = vld [vmem:[%s1 + $0xa4] sm:$0xf]
  %v116 = vld [vmem:[%s1 + $0xa8] sm:$0xf]
  %v117 = vld [vmem:[%s1 + $0xac] sm:$0xf]
  %v118 = vld [vmem:[%s1 + $0xb0] sm:$0xf]
  %v119 = vld [vmem:[%s1 + $0xb4] sm:$0xf]
  %v120 = vld [vmem:[%s1 + $0xb8] sm:$0xf]
  %v121 = vld [vmem:[%s1 + $0xbc] sm:$0xf]
  %v122 = vld [vmem:[%s2] sm:$0x1]
  %v124 = vperm.slane %v122, 0
  %v174 = vunpack.c.l.b16 %v74
  %v175 = vunpack.c.l.b16 %v75
  %v176 = vunpack.c.l.b16 %v76
  %v177 = vunpack.c.l.b16 %v77
  %v178 = vunpack.c.l.b16 %v78
  %v179 = vunpack.c.l.b16 %v79
  %v180 = vunpack.c.l.b16 %v80
  %v181 = vunpack.c.l.b16 %v81
  %v182 = vunpack.c.l.b16 %v82
  %v183 = vunpack.c.l.b16 %v83
  %v184 = vunpack.c.l.b16 %v84
  %v185 = vunpack.c.l.b16 %v85
  %v186 = vunpack.c.l.b16 %v86
  %v187 = vunpack.c.l.b16 %v87
  %v188 = vunpack.c.l.b16 %v88
  %v189 = vunpack.c.l.b16 %v89
  %v190 = vunpack.c.l.b16 %v90
  %v191 = vunpack.c.l.b16 %v91
  %v192 = vunpack.c.l.b16 %v92
  %v193 = vunpack.c.l.b16 %v93
  %v194 = vunpack.c.l.b16 %v94
  %v195 = vunpack.c.l.b16 %v95
  %v196 = vunpack.c.l.b16 %v96
  %v197 = vunpack.c.l.b16 %v97
  %v198 = vunpack.c.l.b16 %v98
  %v199 = vunpack.c.l.b16 %v99
  %v200 = vunpack.c.l.b16 %v100
  %v201 = vunpack.c.l.b16 %v101
  %v202 = vunpack.c.l.b16 %v102
  %v203 = vunpack.c.l.b16 %v103
  %v204 = vunpack.c.l.b16 %v104
  %v205 = vunpack.c.l.b16 %v105
  %v206 = vunpack.c.l.b16 %v106
  %v207 = vunpack.c.l.b16 %v107
  %v208 = vunpack.c.l.b16 %v108
  %v209 = vunpack.c.l.b16 %v109
  %v210 = vunpack.c.l.b16 %v110
  %v211 = vunpack.c.l.b16 %v111
  %v212 = vunpack.c.l.b16 %v112
  %v213 = vunpack.c.l.b16 %v113
  %v214 = vunpack.c.l.b16 %v114
  %v215 = vunpack.c.l.b16 %v115
  %v216 = vunpack.c.l.b16 %v116
  %v217 = vunpack.c.l.b16 %v117
  %v218 = vunpack.c.l.b16 %v118
  %v219 = vunpack.c.l.b16 %v119
  %v220 = vunpack.c.l.b16 %v120
  %v221 = vunpack.c.l.b16 %v121
  %v222 = vpack.c.b16 %v175, %v174
  %v223 = vpack.c.b16 %v177, %v176
  %v224 = vpack.c.b16 %v179, %v178
  %v225 = vpack.c.b16 %v181, %v180
  %v226 = vpack.c.b16 %v183, %v182
  %v227 = vpack.c.b16 %v185, %v184
  %v228 = vpack.c.b16 %v187, %v186
  %v229 = vpack.c.b16 %v189, %v188
  %v230 = vpack.c.b16 %v191, %v190
  %v231 = vpack.c.b16 %v193, %v192
  %v232 = vpack.c.b16 %v195, %v194
  %v233 = vpack.c.b16 %v197, %v196
  %v234 = vpack.c.b16 %v199, %v198
  %v235 = vpack.c.b16 %v201, %v200
  %v236 = vpack.c.b16 %v203, %v202
  %v237 = vpack.c.b16 %v205, %v204
  %v238 = vpack.c.b16 %v207, %v206
  %v239 = vpack.c.b16 %v209, %v208
  %v240 = vpack.c.b16 %v211, %v210
  %v241 = vpack.c.b16 %v213, %v212
  %v242 = vpack.c.b16 %v215, %v214
  %v243 = vpack.c.b16 %v217, %v216
  %v244 = vpack.c.b16 %v219, %v218
  %v245 = vpack.c.b16 %v221, %v220
  %270 = vmatpush.bf16.msra.mxu0 %v229
  %271 = vmatpush.bf16.msra.mxu0 %v228
  %272 = vmatpush.bf16.msra.mxu0 %v227
  %273 = vmatpush.bf16.msra.mxu0 %v226
  %274 = vmatpush.bf16.msra.mxu0 %v225
  %275 = vmatpush.bf16.msra.mxu0 %v224
  %276 = vmatpush.bf16.msra.mxu0 %v223
  %277 = vmatpush.bf16.msra.mxu0 %v222
  %278 = vmatmul.bf16.gmra.mxu0 %v28
  %v279 = vpop.f32.mrf.mxu0
  %v280 = vadd.f32 %v124, %v279
  %v281 = vpop.f32.mrf.mxu0
  %v282 = vadd.f32 %v124, %v281
  %283 = vmatmul.bf16.gmra.mxu0 %v29
  %v284 = vpop.f32.mrf.mxu0
  %v285 = vadd.f32 %v124, %v284
  %v286 = vpop.f32.mrf.mxu0
  %v287 = vadd.f32 %v124, %v286
  %288 = vdwg.mxu0
  %289 = vmatpush.bf16.msra.mxu0 %v237
  %290 = vmatpush.bf16.msra.mxu0 %v236
  %291 = vmatpush.bf16.msra.mxu0 %v235
  %292 = vmatpush.bf16.msra.mxu0 %v234
  %293 = vmatpush.bf16.msra.mxu0 %v233
  %294 = vmatpush.bf16.msra.mxu0 %v232
  %295 = vmatpush.bf16.msra.mxu0 %v231
  %296 = vmatpush.bf16.msra.mxu0 %v230
  %297 = vmatmul.bf16.gmra.mxu0 %v50
  %v298 = vpop.f32.mrf.mxu0
  %v299 = vadd.f32 %v280, %v298
  %v300 = vpop.f32.mrf.mxu0
  %v301 = vadd.f32 %v282, %v300
  %302 = vmatmul.bf16.gmra.mxu0 %v62
  %v303 = vpop.f32.mrf.mxu0
  %v304 = vadd.f32 %v285, %v303
  %v305 = vpop.f32.mrf.mxu0
  %v306 = vadd.f32 %v287, %v305
  %307 = vdwg.mxu0
  %308 = vmatpush.bf16.msra.mxu0 %v245
  %309 = vmatpush.bf16.msra.mxu0 %v244
  %310 = vmatpush.bf16.msra.mxu0 %v243
  %311 = vmatpush.bf16.msra.mxu0 %v242
  %312 = vmatpush.bf16.msra.mxu0 %v241
  %313 = vmatpush.bf16.msra.mxu0 %v240
  %314 = vmatpush.bf16.msra.mxu0 %v239
  %315 = vmatpush.bf16.msra.mxu0 %v238
  %316 = vmatmul.bf16.gmra.mxu0 %v68
  %v317 = vpop.f32.mrf.mxu0
  %v318 = vadd.f32 %v299, %v317
  %v319 = vpop.f32.mrf.mxu0
  %v320 = vadd.f32 %v301, %v319
  %321 = vmatmul.bf16.gmra.mxu0 %v71
  %v322 = vpop.f32.mrf.mxu0
  %v323 = vadd.f32 %v304, %v322
  %v324 = vpop.f32.mrf.mxu0
  %v325 = vadd.f32 %v306, %v324
  %326 = vdwg.mxu0
  %v327 = vmax.f32 %v318, 0.0
  %v328 = vmax.f32 %v320, 0.0
  %v329 = vmax.f32 %v323, 0.0
  %v330 = vmax.f32 %v325, 0.0
  %331 = vst [vmem:[%s3] sm:$0xff] %v327
  %332 = vst [vmem:[%s3 + $0x8] sm:$0xff] %v328
  %333 = vst [vmem:[%s3 + $0x10] sm:$0xff] %v329
  %334 = vst [vmem:[%s3 + $0x18] sm:$0xff] %v330
  // Predicated region
  $region14: #{quantnet_forward.1} parent=0 // pred_check
    _
  $region15: #{quantnet_forward.1} parent=0 // pred_check_branch
    %336 = sbr.rel (0) target = $region17
  $region16: #{quantnet_forward.1} parent=0 // pred_region
    _
  $region17: #{quantnet_forward.1} parent=0 // pred_fallthru
    _
  // Predicated region
  $region18: #{quantnet_forward.1} parent=0 // pred_check
    _
  $region19: #{quantnet_forward.1} parent=0 // pred_check_branch
    %338 = sbr.rel (0) target = $region21
  $region20: #{quantnet_forward.1} parent=0 // pred_region
    _
  $region21: #{quantnet_forward.1} parent=0 // pred_fallthru
    _

</llo_original>
